<compile_context>
chip_gen: v6e
topology: v6e:2x2x1
jax: 0.10.0
libtpu: 0.0.40
codegen_flags: <defaults>
</compile_context>

<pallas_src>
import functools

import numpy as np
import jax
import jax.numpy as jnp
from jax.experimental import pallas as pl
from jax.experimental.pallas import tpu as pltpu


# ----------------------------------------------------------------------------
# Topology glue (equivalent of SubdivideMeshes.__init__ / subdivide_faces).
# ----------------------------------------------------------------------------
def _round_up(x: int, m: int) -> int:
    return ((x + m - 1) // m) * m


def build_edges_and_face_to_edge(faces: np.ndarray):
    """faces (F, 3) -> (edges (E, 2), faces_to_edges (F, 3)).

    Matches pytorch3d conventions: edge k of a face is the edge *opposite*
    vertex k, edges stored smaller-index-first and sorted lexicographically.
    """
    v0, v1, v2 = faces[:, 0], faces[:, 1], faces[:, 2]
    e0 = np.stack([v1, v2], axis=1)   # opposite v0
    e1 = np.stack([v0, v2], axis=1)   # opposite v1
    e2 = np.stack([v0, v1], axis=1)   # opposite v2
    all_edges = np.concatenate([e0, e1, e2], axis=0)
    all_edges = np.sort(all_edges, axis=1)
    edges, inverse = np.unique(all_edges, axis=0, return_inverse=True)
    faces_to_edges = np.asarray(inverse).reshape(-1).reshape(3, -1).T   # (F, 3)
    return edges.astype(np.int64), faces_to_edges.astype(np.int64)


def subdivide_faces(faces: np.ndarray, faces_to_edges: np.ndarray, num_verts: int):
    """Equivalent of SubdivideMeshes.subdivide_faces -> (4F, 3)."""
    fe = faces_to_edges + num_verts
    f0 = np.stack([faces[:, 0], fe[:, 2], fe[:, 1]], axis=1)
    f1 = np.stack([faces[:, 1], fe[:, 0], fe[:, 2]], axis=1)
    f2 = np.stack([faces[:, 2], fe[:, 1], fe[:, 0]], axis=1)
    f3 = fe
    return np.concatenate([f0, f1, f2, f3], axis=0)


def _pick_tile(dim: int, max_tile: int = 512, prefer_two_tiles: bool = False):
    """Lane-aligned tile + padded extent (padded is a multiple of the tile)."""
    padded = _round_up(max(dim, 1), 128)
    tile = min(max_tile, padded)
    if prefer_two_tiles and padded > 128:
        # v7x megacore: try to give the parallel E axis >= 2 tiles.
        tile = min(tile, max(128, _round_up(-(-padded // 2), 128)))
    pad = _round_up(padded, tile)
    return tile, pad


def build_band_averaging_matrix(edges: np.ndarray, tv: int, te: int,
                                v_pad: int, e_pad: int):
    """Band-compressed transposed averaging matrix.

    Returns:
      w_band  (band*tv, e_pad) f32 : rows of W^T shifted so that the non-zero
              V-range of each E-tile starts at row 0 of its band window.
      starts  (e_pad//te,) int32   : first V-tile index visited by each E-tile.
      band    int                  : number of V-tiles visited per E-tile.
    """
    E = edges.shape[0]
    num_e_tiles = e_pad // te
    num_v_tiles = v_pad // tv
    starts = np.zeros(num_e_tiles, np.int64)
    widths = np.ones(num_e_tiles, np.int64)
    for j in range(num_e_tiles):
        lo, hi = j * te, min((j + 1) * te, E)
        if lo < E:
            sub = edges[lo:hi]
            vmin, vmax = int(sub.min()), int(sub.max())
            starts[j] = vmin // tv
            widths[j] = vmax // tv - vmin // tv + 1
    band = int(widths.max())
    # Clamp so every visited V-tile index stays in range; the shifted window
    # still covers each E-tile's non-zero rows, and each tile is visited once.
    starts = np.minimum(starts, num_v_tiles - band)

    w_band = np.zeros((band * tv, e_pad), np.float32)
    if E > 0:
        cols = np.arange(E)
        base = starts[cols // te] * tv
        w_band[edges[:, 0] - base, cols] = 0.5
        w_band[edges[:, 1] - base, cols] = 0.5
    return w_band, starts.astype(np.int32), band


# ----------------------------------------------------------------------------
# Pallas kernel: band-indexed, lane-dense edge-midpoint matmul.
# ----------------------------------------------------------------------------
def _edge_midpoint_kernel(vstart_ref, x_ref, w_ref, out_ref):
    # vstart_ref : SMEM (num_e_tiles,) int32  -- used only by the index_maps.
    # x_ref      : (R_pad, TV) f32   verts^T band V-tile (R_pad = pad(3N, 8))
    # w_ref      : (TV, TE)   bf16   band-compressed averaging matrix tile
    # out_ref    : (R_pad, TE) f32   midpoints^T tile, resident accumulator
    del vstart_ref
    @pl.when(pl.program_id(1) == 0)
    def _():
        out_ref[...] = jnp.zeros_like(out_ref)

    # bf16 W tile fed to the dot (0.0/0.5 exact); f32 accumulation.
    out_ref[...] += jnp.dot(x_ref[...], w_ref[...],
                            preferred_element_type=jnp.float32)


def _edge_midpoints_T(x_pad: jax.Array, w_band: jax.Array, vstarts: jax.Array,
                      *, tv: int, te: int):
    """x_pad (R_pad, V_pad) f32, w_band (band*TV, E_pad) bf16 -> (R_pad, E_pad)."""
    r_pad, _ = x_pad.shape
    band_rows, e_pad = w_band.shape
    band = band_rows // tv
    num_e_tiles = e_pad // te
    grid = (num_e_tiles, band)          # E tiles parallel, band V-tiles reduction

    # Size-derived VMEM budget (double-buffered blocks), capped for v7x.
    x_blk = r_pad * tv * 4
    w_blk = tv * te * w_band.dtype.itemsize
    o_blk = r_pad * te * 4
    vmem_limit = int(min(max(2 * (x_blk + w_blk + o_blk) + (2 << 20), 8 << 20),
                         48 << 20))

    cost = pl.CostEstimate(
        flops=2 * r_pad * band_rows * e_pad,
        transcendentals=0,
        bytes_accessed=int(num_e_tiles * band * (x_blk + w_blk) + r_pad * e_pad * 4),
    )

    return pl.pallas_call(
        _edge_midpoint_kernel,
        out_shape=jax.ShapeDtypeStruct((r_pad, e_pad), jnp.float32),
        grid_spec=pltpu.PrefetchScalarGridSpec(
            num_scalar_prefetch=1,
            grid=grid,
            in_specs=[
                # X: only the band V-tiles of this E-tile are streamed.
                pl.BlockSpec((r_pad, tv), lambda e, v, vs: (0, vs[e] + v)),
                # Band-compressed W: row-block == position within the band.
                pl.BlockSpec((tv, te), lambda e, v, vs: (v, e)),
            ],
            # Same output block across the reduction axis -> resident accumulator.
            out_specs=pl.BlockSpec((r_pad, te), lambda e, v, vs: (0, e)),
        ),
        compiler_params=pltpu.CompilerParams(
            dimension_semantics=("parallel", "arbitrary"),
            vmem_limit_bytes=vmem_limit,
        ),
        cost_estimate=cost,
    )(vstarts, x_pad, w_band)


@functools.partial(jax.jit,
                   static_argnames=("num_edges", "v_pad", "tv", "te"))
def _subdivide_verts(verts: jax.Array, w_band: jax.Array, vstarts: jax.Array,
                     *, num_edges: int, v_pad: int, tv: int, te: int):
    """verts (N, V, 3) f32 -> (N, V+E, 3) f32 = [verts ; edge midpoints]."""
    N, V, D = verts.shape
    R = N * D
    r_pad = _round_up(R, 8)                       # unmasked sublane ops
    # (N, V, 3) -> (3N, V): batch*xyz on sublanes, V on lanes.
    x = jnp.swapaxes(verts, 1, 2).reshape(R, V)
    x_pad = jnp.pad(x, ((0, r_pad - R), (0, v_pad - V)))
    mid_t = _edge_midpoints_T(x_pad, w_band, vstarts, tv=tv, te=te)  # (R_pad, E_pad)
    # Concatenate in the lane-dense transposed layout, then ONE final transpose.
    full_t = jnp.concatenate([x, mid_t[:R, :num_edges]], axis=1)     # (3N, V+E)
    new_verts = jnp.swapaxes(full_t.reshape(N, D, V + num_edges), 1, 2)
    return new_verts                                                  # (N, V+E, 3)


# ----------------------------------------------------------------------------
# Module-equivalent wrapper.
# ----------------------------------------------------------------------------
class SubdivideMeshesPallas:
    """Mirrors SubdivideMeshes: __init__ precomputes the subdivided face
    topology from a reference face set; __call__ subdivides padded verts."""

    def __init__(self, faces: np.ndarray, num_verts: int, *, max_tile: int = 512):
        faces = np.asarray(faces, dtype=np.int64)
        self._edges, f2e = build_edges_and_face_to_edge(faces)
        self._subdivided_faces = jnp.asarray(
            subdivide_faces(faces, f2e, num_verts).astype(np.int32))   # (4F, 3)

        E = int(self._edges.shape[0])
        self._num_edges = E
        # E axis prefers >=2 tiles (v7x megacore); V axis is the reduction.
        self._te, e_pad = _pick_tile(E, max_tile, prefer_two_tiles=True)
        self._tv, v_pad = _pick_tile(num_verts, max_tile)
        self._v_pad = v_pad

        w_band, starts, _band = build_band_averaging_matrix(
            self._edges, self._tv, self._te, v_pad, e_pad)
        # bf16 halves HBM/VMEM traffic for W; 0.0/0.5 are exact in bf16.
        self._w_band = jnp.asarray(w_band, dtype=jnp.bfloat16)
        self._vstarts = jnp.asarray(starts)                            # int32
        # TODO(synk): for very large batches (3N*tile blocks near 48 MiB),
        # shrink te/tv at init time from a batch-size hint.
        # TODO(synk): optional per-vertex `feats` subdivision path not implemented.

    def __call__(self, verts_padded: jax.Array):
        # verts_padded: (N, V, 3) f32
        new_verts = _subdivide_verts(
            verts_padded, self._w_band, self._vstarts,
            num_edges=self._num_edges, v_pad=self._v_pad,
            tv=self._tv, te=self._te)
        # Shared (4F, 3) face table for every mesh in the batch -- equivalent
        # to torch's zero-copy `.expand(N, -1, -1)`, without N HBM copies.
        new_faces = self._subdivided_faces
        # TODO(synk): pytorch3d wraps these in a Meshes object; raw arrays returned.
        return new_verts, new_faces


# ----------------------------------------------------------------------------
# Example / self-test.
# ----------------------------------------------------------------------------
def make_grid_faces(n: int) -> np.ndarray:
    """Triangulated (n x n) vertex grid -> (2*(n-1)^2, 3) faces."""
    idx = np.arange(n * n).reshape(n, n)
    a = idx[:-1, :-1].ravel()
    b = idx[:-1, 1:].ravel()
    c = idx[1:, :-1].ravel()
    d = idx[1:, 1:].ravel()
    tri1 = np.stack([a, b, c], axis=1)
    tri2 = np.stack([b, d, c], axis=1)
    return np.concatenate([tri1, tri2], axis=0).astype(np.int64)


if __name__ == "__main__":
    # Small deterministic batch of meshes sharing one topology.
    n_grid = 5
    V = n_grid * n_grid                     # 25 vertices
    N = 2                                   # batch of 2 meshes
    faces_np = make_grid_faces(n_grid)      # (32, 3) -> E = 56, 4F = 128

    key = jax.random.PRNGKey(0)
    verts = jax.random.normal(key, (N, V, 3), dtype=jnp.float32)

    module = SubdivideMeshesPallas(faces_np, V)
    new_verts, new_faces = module(verts)
    new_verts = jax.block_until_ready(new_verts)

    # Reference (plain JAX) check of forward semantics:
    edges = jnp.asarray(module._edges.astype(np.int32))         # (E, 2)
    ref_mid = verts[:, edges].mean(axis=2)                      # (N, E, 3)
    ref = jnp.concatenate([verts, ref_mid], axis=1)             # (N, V+E, 3)
    assert new_verts.shape == ref.shape
    assert new_faces.shape == (4 * faces_np.shape[0], 3)
    np.testing.assert_allclose(np.asarray(new_verts), np.asarray(ref),
                               rtol=1e-6, atol=1e-6)

    print("KERNEL_OK")
</pallas_src>

<mosaic_0001>
module attributes {stable_mosaic.version = 11 : i64} {
  func.func @_edge_midpoint_kernel(%arg0: i32, %arg1: i32, %arg2: memref<1xi32, #tpu.memory_space<smem>>, %arg3: memref<8x128xf32, #tpu.memory_space<vmem>>, %arg4: memref<128x128xbf16, #tpu.memory_space<vmem>>, %arg5: memref<8x128xf32, #tpu.memory_space<vmem>>) attributes {dimension_semantics = [#tpu.dimension_semantics<parallel>, #tpu.dimension_semantics<arbitrary>], iteration_bounds = array<i64: 1, 1>, scalar_prefetch = 1 : i64, scratch_operands = 0 : i64, tpu.core_type = #tpu.core_type<tc>, window_params = [{transform_indices = @transform_0, window_bounds = array<i64: 8, 128>}, {transform_indices = @transform_1, window_bounds = array<i64: 128, 128>}, {transform_indices = @transform_2, window_bounds = array<i64: 8, 128>}]} {
    %c0_i32 = arith.constant 0 : i32
    %0 = arith.cmpi eq, %arg1, %c0_i32 : i32
    %1 = arith.extui %0 : i1 to i32
    %c0_i32_0 = arith.constant 0 : i32
    %2 = arith.cmpi ne, %1, %c0_i32_0 : i32
    scf.if %2 {
      %cst_8 = arith.constant 0.000000e+00 : f32
      %9 = vector.broadcast %cst_8 : f32 to vector<8x128xf32>
      %c0_9 = arith.constant 0 : index
      %c0_10 = arith.constant 0 : index
      %10 = vector.load %arg5[%c0_9, %c0_10] : memref<8x128xf32, #tpu.memory_space<vmem>>, vector<8x128xf32>
      tpu.vector_store %arg5[%c0_9, %c0_10], %9 {strides = array<i32>} : memref<8x128xf32, #tpu.memory_space<vmem>>, vector<8x128xf32>,
    } else {
    }
    %c0 = arith.constant 0 : index
    %c0_1 = arith.constant 0 : index
    %3 = vector.load %arg5[%c0, %c0_1] : memref<8x128xf32, #tpu.memory_space<vmem>>, vector<8x128xf32>
    %c0_2 = arith.constant 0 : index
    %c0_3 = arith.constant 0 : index
    %4 = vector.load %arg3[%c0_2, %c0_3] : memref<8x128xf32, #tpu.memory_space<vmem>>, vector<8x128xf32>
    %c0_4 = arith.constant 0 : index
    %c0_5 = arith.constant 0 : index
    %5 = vector.load %arg4[%c0_4, %c0_5] : memref<128x128xbf16, #tpu.memory_space<vmem>>, vector<128x128xbf16>
    %cst = arith.constant dense<0.000000e+00> : vector<8x128xf32>
    %6 = tpu.matmul %4, %5, %cst {dimension_numbers = #tpu.dot_dimension_numbers<[1], [0], [0], [1], [0, 0, 1, 1], [], []>} : vector<8x128xf32>, vector<128x128xbf16>, vector<8x128xf32> -> vector<8x128xf32>
    %7 = arith.addf %3, %6 : vector<8x128xf32>
    %c0_6 = arith.constant 0 : index
    %c0_7 = arith.constant 0 : index
    %8 = vector.load %arg5[%c0_6, %c0_7] : memref<8x128xf32, #tpu.memory_space<vmem>>, vector<8x128xf32>
    tpu.vector_store %arg5[%c0_6, %c0_7], %7 {strides = array<i32>} : memref<8x128xf32, #tpu.memory_space<vmem>>, vector<8x128xf32>,
    return
  }
  func.func @transform_0(%arg0: i32, %arg1: i32, %arg2: memref<1xi32, #tpu.memory_space<smem>>) -> (i32, i32) {
    %0 = arith.index_cast %arg0 : i32 to index
    %1 = memref.load %arg2[%0] : memref<1xi32, #tpu.memory_space<smem>>
    %2 = arith.addi %1, %arg1 : i32
    %c0_i32 = arith.constant 0 : i32
    %c0_i32_0 = arith.constant 0 : i32
    return %c0_i32, %2 : i32, i32
  }
  func.func @transform_1(%arg0: i32, %arg1: i32, %arg2: memref<1xi32, #tpu.memory_space<smem>>) -> (i32, i32) {
    %c0_i32 = arith.constant 0 : i32
    return %arg1, %arg0 : i32, i32
  }
  func.func @transform_2(%arg0: i32, %arg1: i32, %arg2: memref<1xi32, #tpu.memory_space<smem>>) -> (i32, i32) {
    %c0_i32 = arith.constant 0 : i32
    %c0_i32_0 = arith.constant 0 : i32
    return %c0_i32, %arg0 : i32, i32
  }
}

</mosaic_0001>

<llo_original>
// kernel: _subdivide_verts.1
$region0: #{_subdivide_verts.1}
  #allocation0 [shape = 'u32[]', space=smem, size = 0x4, offset = 0x4, fixed_abs, tag = 'smem constant byte address 0x4 - core index']
  #allocation1 [shape = 'u32[144,128]{1,0:T(1,128)}', space=vmem, size = 0x12000, scoped, tag = 'internal scratch']
  #allocation2 [shape = 's32[1]{0}', space=sflag, size = 0x4, scoped, tag = 'scoped memory for _subdivide_verts.1']
  #allocation3 [shape = 's32[1]{0:T(128)S(6)}', space=smem, size = 0x200, scoped, tag = 'prefetched SMEM operand 0']
  %s0 = inlined_call_operand.<no memory space> [shape: s32[1], index: 0, kind: input, shape index: {}]
  %s1 = inlined_call_operand.vmem [shape: f32[8,128], index: 1, kind: input, shape index: {}]
  %s2 = inlined_call_operand.hbm [shape: bf16[128,128], index: 2, kind: input, shape index: {}]
  %s3 = inlined_call_operand.vmem [shape: f32[8,128], index: 3, kind: output, shape index: {}]
  %s4 = sld [smem:[#allocation0]]
  $region26: #{_subdivide_verts.1} parent=0
    _
  %s6 = ssub.s32 1, %s4
  %s7 = scalar_select 0, %s6, %s4
  %8 = sst [smem:[#allocation3]] %s0
  $region1: #{_subdivide_verts.1} parent=0
    #allocation4 [shape = 'u8[32768]{0}', space=vmem, size = 0x8000, scoped, tag = 'input window, operand 2, single buffered']
    #allocation5 [shape = 's32[1]{0}', space=sflag, size = 0x4, scoped, tag = 'scoped memory for _subdivide_verts.1']
    %9 = vsyncpa [#allocation5], 0
    // Predicated region
    $region2: #{_subdivide_verts.1} parent=1 // pred_check
      _
    $region3: #{_subdivide_verts.1} parent=1 // pred_check_branch
      %11 = sbr.rel (0) target = $region5
    $region4: #{_subdivide_verts.1} parent=1 // pred_region
      %s12 = sld [smem:[#allocation3]]
      %s13 = sadd.s32 %s12, 0
      %p14 = scmp.lt.s32.totalorder %s13, 0
      %s15 = scalar_select %p14, %s13, 0
      %s16 = smul.addr %s15, 8
      %s17 = scalar_lea.vmem %s1, %s16
      %s18 = sld [smem:[#allocation3]]
      %s19 = sadd.s32 %s18, 0
    $region5: #{_subdivide_verts.1} parent=1 // pred_fallthru
      _
    // Predicated region
    $region6: #{_subdivide_verts.1} parent=1 // pred_check
      _
    $region7: #{_subdivide_verts.1} parent=1 // pred_check_branch
      %21 = sbr.rel (0) target = $region9
    $region8: #{_subdivide_verts.1} parent=1 // pred_region
      %s23 = ssub.s32 1024, 1024
      %24 = vsyncadd [#allocation5], %s23
      %s25 = sshll.u32 [#allocation4], 4
      %s26 = int_to_ptr.vmem [resolvable:$true] %s25
      %31 = dma.hbm_to_vmem [thread:$0]  %s2, 1024, %s26, [#allocation5], 64, 64, 4
    $region9: #{_subdivide_verts.1} parent=1 // pred_fallthru
      _
    // Predicated region
    $region10: #{_subdivide_verts.1} parent=1 // pred_check
      _
    $region11: #{_subdivide_verts.1} parent=1 // pred_check_branch
      %33 = sbr.rel (0) target = $region13
    $region12: #{_subdivide_verts.1} parent=1 // pred_region
      %34 = dma.done [#allocation5], 1024
    $region13: #{_subdivide_verts.1} parent=1 // pred_fallthru
      _
    %s35 = sld [smem:[#allocation3]]
    %s36 = sadd.s32 %s35, 0
    %p37 = scmp.lt.s32.totalorder %s36, 0
    %s38 = scalar_select %p37, %s36, 0
    %s39 = smul.addr %s38, 8
    %s40 = scalar_lea.vmem %s1, %s39
    %s41 = sld [smem:[#allocation3]]
    %s42 = sadd.s32 %s41, 0
    %p43 = scmp.lt.s32.totalorder %s42, 0
    %s44 = scalar_select %p43, %s42, 0
    %s45 = smul.addr %s44, 8
    %s46 = scalar_lea.vmem %s1, %s45
    %s47 = sld [smem:[#allocation3]]
    %s48 = sadd.s32 %s47, 0
    %p50 = scmp.eq.s32.totalorder 0, 0
    // Predicated region
    $region14: #{_subdivide_verts.1} parent=1 // pred_check
      %p51 = pneg %p50
    $region15: #{_subdivide_verts.1} parent=1 // pred_check_branch
      %53 = sbr.rel (%p51) target = $region17
    $region16: #{_subdivide_verts.1} parent=1 // pred_region
      %54 = vst [vmem:[%s3] sm:$0xff] 0.0
    $region17: #{_subdivide_verts.1} parent=1 // pred_fallthru
      _
    %v55 = vld [vmem:[%s3] sm:$0xff]
    %v56 = vld [vmem:[%s46] sm:$0xff]
    %v57 = vld [vmem:[#allocation4] sm:$0xf]
    %v58 = vld [vmem:[#allocation4 + $0x4] sm:$0xf]
    %v59 = vld [vmem:[#allocation4 + $0x8] sm:$0xf]
    %v60 = vld [vmem:[#allocation4 + $0xc] sm:$0xf]
    %v61 = vld [vmem:[#allocation4 + $0x10] sm:$0xf]
    %v62 = vld [vmem:[#allocation4 + $0x14] sm:$0xf]
    %v63 = vld [vmem:[#allocation4 + $0x18] sm:$0xf]
    %v64 = vld [vmem:[#allocation4 + $0x1c] sm:$0xf]
    %v65 = vld [vmem:[#allocation4 + $0x20] sm:$0xf]
    %v66 = vld [vmem:[#allocation4 + $0x24] sm:$0xf]
    %v67 = vld [vmem:[#allocation4 + $0x28] sm:$0xf]
    %v68 = vld [vmem:[#allocation4 + $0x2c] sm:$0xf]
    %v69 = vld [vmem:[#allocation4 + $0x30] sm:$0xf]
    %v70 = vld [vmem:[#allocation4 + $0x34] sm:$0xf]
    %v71 = vld [vmem:[#allocation4 + $0x38] sm:$0xf]
    %v72 = vld [vmem:[#allocation4 + $0x3c] sm:$0xf]
    %v89 = vunpack.c.l.b16 %v57
    %v90 = vunpack.c.l.b16 %v58
    %v91 = vunpack.c.l.b16 %v59
    %v92 = vunpack.c.l.b16 %v60
    %v93 = vunpack.c.l.b16 %v61
    %v94 = vunpack.c.l.b16 %v62
    %v95 = vunpack.c.l.b16 %v63
    %v96 = vunpack.c.l.b16 %v64
    %v97 = vunpack.c.l.b16 %v65
    %v98 = vunpack.c.l.b16 %v66
    %v99 = vunpack.c.l.b16 %v67
    %v100 = vunpack.c.l.b16 %v68
    %v101 = vunpack.c.l.b16 %v69
    %v102 = vunpack.c.l.b16 %v70
    %v103 = vunpack.c.l.b16 %v71
    %v104 = vunpack.c.l.b16 %v72
    %v105 = vpack.c.b16 %v90, %v89
    %v106 = vpack.c.b16 %v92, %v91
    %v107 = vpack.c.b16 %v94, %v93
    %v108 = vpack.c.b16 %v96, %v95
    %v109 = vpack.c.b16 %v98, %v97
    %v110 = vpack.c.b16 %v100, %v99
    %v111 = vpack.c.b16 %v102, %v101
    %v112 = vpack.c.b16 %v104, %v103
    %121 = vmatprep.subr.bf16.mxu0 0
    %122 = vmatpush1.bf16.msra.mxu0 %v112
    %123 = vmatprep.subr.bf16.mxu0 0
    %124 = vmatpush1.bf16.msra.mxu0 %v111
    %125 = vmatprep.subr.bf16.mxu0 0
    %126 = vmatpush1.bf16.msra.mxu0 %v110
    %127 = vmatprep.subr.bf16.mxu0 0
    %128 = vmatpush1.bf16.msra.mxu0 %v109
    %129 = vmatprep.subr.bf16.mxu0 0
    %130 = vmatpush1.bf16.msra.mxu0 %v108
    %131 = vmatprep.subr.bf16.mxu0 0
    %132 = vmatpush1.bf16.msra.mxu0 %v107
    %133 = vmatprep.subr.bf16.mxu0 0
    %134 = vmatpush1.bf16.msra.mxu0 %v106
    %135 = vmatprep.subr.bf16.mxu0 0
    %136 = vmatpush1.bf16.msra.mxu0 %v105
    %137 = vmatprep.subr.bf16.mxu0 0
    %138 = vmatpush2.bf16.msra.mxu0 0
    %139 = vmatprep.subr.bf16.mxu0 0
    %140 = vmatpush2.bf16.msra.mxu0 0
    %141 = vmatprep.subr.bf16.mxu0 0
    %142 = vmatpush2.bf16.msra.mxu0 0
    %143 = vmatprep.subr.bf16.mxu0 0
    %144 = vmatpush2.bf16.msra.mxu0 0
    %145 = vmatprep.subr.bf16.mxu0 0
    %146 = vmatpush2.bf16.msra.mxu0 0
    %147 = vmatprep.subr.bf16.mxu0 0
    %148 = vmatpush2.bf16.msra.mxu0 0
    %149 = vmatprep.subr.bf16.mxu0 0
    %150 = vmatpush2.bf16.msra.mxu0 0
    %151 = vmatprep.subr.bf16.mxu0 0
    %152 = vmatpush2.bf16.msra.mxu0 0
    %153 = vmatprep.mubr.f32.mxu0 0.0
    %154 = vmatmul.mubr.f32.gmra.mxu0 %v56
    %v155 = vpop.f32.mrf.mxu0
    %v156 = vadd.f32 0.0, %v155
    %v157 = vpop.f32.mrf.mxu0
    %158 = vdwg.mxu0
    %v159 = vadd.f32 %v55, %v156
    %160 = vst [vmem:[%s3] sm:$0xff] %v159
    // Predicated region
    $region18: #{_subdivide_verts.1} parent=1 // pred_check
      _
    $region19: #{_subdivide_verts.1} parent=1 // pred_check_branch
      %162 = sbr.rel (0) target = $region21
    $region20: #{_subdivide_verts.1} parent=1 // pred_region
      _
    $region21: #{_subdivide_verts.1} parent=1 // pred_fallthru
      _
    // Predicated region
    $region22: #{_subdivide_verts.1} parent=1 // pred_check
      _
    $region23: #{_subdivide_verts.1} parent=1 // pred_check_branch
      %164 = sbr.rel (0) target = $region25
    $region24: #{_subdivide_verts.1} parent=1 // pred_region
      _
    $region25: #{_subdivide_verts.1} parent=1 // pred_fallthru
      _
    %165 = vsyncpa [#allocation5], 1

</llo_original>
